<compile_context>
chip_gen: v6e
topology: v6e:2x2x1
jax: 0.10.0
libtpu: 0.0.40
codegen_flags: <defaults>
</compile_context>

<pallas_src>
import math

import jax
import jax.numpy as jnp
from jax.experimental import pallas as pl
from jax.experimental.pallas import tpu as pltpu


# Logical per-layer dims of the PyTorch module (encoder then decoder).
DIMS = [(200, 100), (100, 100), (100, 50), (50, 100), (100, 200)]
F_IN = 200          # input features (K of the collapsed matmul)
F_OUT = 200         # logical output features
N_PAD = 256         # lane-padded output width (lane-dense stores)


def _round_up(x, m):
    return (x + m - 1) // m * m


def _choose_tile_b(B, tile_b):
    """Batch tile: multiple of 16, >=2 grid tiles when possible (v7x megacore)."""
    b16 = _round_up(max(B, 1), 16)
    tile_b = _round_up(max(16, tile_b), 16)
    if b16 >= 32:
        tile_b = min(tile_b, _round_up((b16 + 1) // 2, 16))
    return min(tile_b, b16)


# ----------------------------------------------------------------------------
# Pallas kernel: single collapsed affine layer.
#   x   (tile_b, 200)  f32 (or bf16)  -> cast to bf16 in VMEM
#   W   (200, 256)     bf16, VMEM-resident (constant index_map)
#   b   (1, 256)       f32,  VMEM-resident
#   out (tile_b, 256)  bf16, lane-dense store
# ----------------------------------------------------------------------------
def dae_kernel(x_ref, w_ref, b_ref, o_ref):
    h = x_ref[...].astype(jnp.bfloat16)                       # (tile_b, 200)
    acc = jnp.dot(h, w_ref[...], preferred_element_type=jnp.float32)
    o_ref[...] = (acc + b_ref[...]).astype(o_ref.dtype)       # f32 bias, bf16 store


def dae_forward(x, w_eff, b_eff, *, tile_b=512):
    """x: (B, 200); w_eff: (200, 256) bf16; b_eff: (1, 256) f32.

    Returns the padded (B_pad, 256) bf16 slab; valid data is [:B, :200].
    """
    B, F = x.shape
    assert F == F_IN and w_eff.shape == (F_IN, N_PAD) and b_eff.shape == (1, N_PAD)

    tile_b = _choose_tile_b(B, tile_b)
    B_pad = _round_up(B, tile_b)
    # Only copy x if the batch actually needs padding (no feature pad, no cast).
    xp = x if B_pad == B else jnp.zeros((B_pad, F), x.dtype).at[:B].set(x)

    flops = 2 * B_pad * F_IN * N_PAD
    bytes_accessed = (xp.size * xp.dtype.itemsize      # x in
                      + B_pad * N_PAD * 2              # bf16 out
                      + w_eff.size * 2 + b_eff.size * 4)

    return pl.pallas_call(
        dae_kernel,
        out_shape=jax.ShapeDtypeStruct((B_pad, N_PAD), jnp.bfloat16),
        grid=(B_pad // tile_b,),
        in_specs=[
            # x: full-feature block (200 == full array dim), batch tiled.
            pl.BlockSpec((tile_b, F_IN), lambda i: (i, 0)),
            # Collapsed weight / bias: constant index_map -> VMEM resident.
            pl.BlockSpec((F_IN, N_PAD), lambda i: (0, 0)),
            pl.BlockSpec((1, N_PAD), lambda i: (0, 0)),
        ],
        out_specs=pl.BlockSpec((tile_b, N_PAD), lambda i: (i, 0)),
        compiler_params=pltpu.CompilerParams(
            dimension_semantics=("parallel",)),
        cost_estimate=pl.CostEstimate(
            flops=flops, transcendentals=0, bytes_accessed=bytes_accessed),
    )(xp, w_eff, b_eff)


# ----------------------------------------------------------------------------
# BatchSwapNoise(0.15) -- stochastic row-swap noise (fastai-style), JAX glue.
# Identity in eval mode, matching nn.Module eval().
# ----------------------------------------------------------------------------
def batch_swap_noise(key, x, p=0.15, training=True):
    if not training:
        return x
    B, F = x.shape
    k1, k2 = jax.random.split(key)
    mask = jax.random.uniform(k1, (B, F)) > (1.0 - p)
    l1 = jnp.floor(jax.random.uniform(k2, (B, F)) * B).astype(jnp.int32)
    l2 = mask.astype(jnp.int32) * F
    res = (l1 * l2).reshape(-1)
    idx = jnp.arange(B * F, dtype=jnp.int32) + res
    idx = jnp.where(idx >= B * F, idx - B * F, idx)
    return x.reshape(-1)[idx].reshape(B, F)


# ----------------------------------------------------------------------------
# Parameter init (PyTorch nn.Linear-style uniform bounds), layer collapse,
# and lane padding of the collapsed affine.
# ----------------------------------------------------------------------------
def init_linear(key, fan_in, fan_out):
    kw, kb = jax.random.split(key)
    bound = 1.0 / math.sqrt(fan_in)
    w = jax.random.uniform(kw, (fan_in, fan_out), jnp.float32, -bound, bound)
    b = jax.random.uniform(kb, (1, fan_out), jnp.float32, -bound, bound)
    return w, b


def init_params(key):
    keys = jax.random.split(key, len(DIMS))
    return [init_linear(k, fi, fo) for k, (fi, fo) in zip(keys, DIMS)]


def collapse_params(params):
    """Compose 5 affine layers into one (exact: no nonlinearities), in f32."""
    w_eff, b_eff = params[0]
    for w, b in params[1:]:
        b_eff = b_eff @ w + b
        w_eff = w_eff @ w
    return w_eff, b_eff                    # (200, 200) f32, (1, 200) f32


def pad_collapsed(w_eff, b_eff):
    """Pad output dim to 256 lanes; single bf16 cast of the composed weight."""
    wp = jnp.zeros((F_IN, N_PAD), jnp.float32).at[:, :F_OUT].set(w_eff)
    bp = jnp.zeros((1, N_PAD), jnp.float32).at[:, :F_OUT].set(b_eff)
    return wp.astype(jnp.bfloat16), bp


# Pure-JAX f32 per-layer reference for correctness check.
def dae_reference(x, params):
    h = x
    for w, b in params:
        h = h @ w + b
    return h


if __name__ == "__main__":
    key = jax.random.PRNGKey(0)
    k_x, k_noise, k_params = jax.random.split(key, 3)

    B = 8
    xb = jax.random.normal(k_x, (B, 200), dtype=jnp.float32)
    params = init_params(k_params)
    w_eff, b_eff = collapse_params(params)
    w_pad, b_pad = pad_collapsed(w_eff, b_eff)

    # noise (training-mode swap noise; identity in eval) -> collapsed affine kernel
    x_noised = batch_swap_noise(k_noise, xb, p=0.15, training=True)
    out_slab = dae_forward(x_noised, w_pad, b_pad)
    out_slab = jax.block_until_ready(out_slab)

    # Consumer-side crop of the padded slab (only done here for verification).
    out = out_slab[:B, :F_OUT].astype(jnp.float32)

    ref = dae_reference(x_noised, params)
    assert out.shape == (B, F_OUT), out.shape
    # bf16 x/weights + bf16 output with f32 accumulation -> loosened tolerance.
    assert jnp.allclose(out, ref, atol=3e-2, rtol=3e-2), "mismatch vs reference"

    print("KERNEL_OK")
</pallas_src>

<mosaic_0001>
module attributes {stable_mosaic.version = 11 : i64} {
  func.func @dae_kernel(%arg0: i32, %arg1: memref<16x200xf32, #tpu.memory_space<vmem>>, %arg2: memref<200x256xbf16, #tpu.memory_space<vmem>>, %arg3: memref<1x256xf32, #tpu.memory_space<vmem>>, %arg4: memref<16x256xbf16, #tpu.memory_space<vmem>>) attributes {dimension_semantics = [#tpu.dimension_semantics<parallel>], iteration_bounds = array<i64: 1>, scalar_prefetch = 0 : i64, scratch_operands = 0 : i64, tpu.core_type = #tpu.core_type<tc>, window_params = [{transform_indices = @transform_0, window_bounds = array<i64: 16, 200>}, {pipeline_mode = #tpu.pipeline_mode<synchronous>, transform_indices = @transform_1, window_bounds = array<i64: 200, 256>}, {pipeline_mode = #tpu.pipeline_mode<synchronous>, transform_indices = @transform_2, window_bounds = array<i64: 1, 256>}, {transform_indices = @transform_3, window_bounds = array<i64: 16, 256>}]} {
    %c0 = arith.constant 0 : index
    %c0_0 = arith.constant 0 : index
    %0 = vector.load %arg1[%c0, %c0_0] : memref<16x200xf32, #tpu.memory_space<vmem>>, vector<16x200xf32>
    %1 = arith.truncf %0 : vector<16x200xf32> to vector<16x200xbf16>
    %c0_1 = arith.constant 0 : index
    %c0_2 = arith.constant 0 : index
    %2 = vector.load %arg2[%c0_1, %c0_2] : memref<200x256xbf16, #tpu.memory_space<vmem>>, vector<200x256xbf16>
    %cst = arith.constant dense<0.000000e+00> : vector<16x256xf32>
    %3 = tpu.matmul %1, %2, %cst {dimension_numbers = #tpu.dot_dimension_numbers<[1], [0], [0], [1], [0, 0, 1, 1], [], []>} : vector<16x200xbf16>, vector<200x256xbf16>, vector<16x256xf32> -> vector<16x256xf32>
    %c0_3 = arith.constant 0 : index
    %c0_4 = arith.constant 0 : index
    %4 = vector.load %arg3[%c0_3, %c0_4] : memref<1x256xf32, #tpu.memory_space<vmem>>, vector<1x256xf32>
    %5 = vector.broadcast %4 : vector<1x256xf32> to vector<16x256xf32>
    %6 = arith.addf %3, %5 : vector<16x256xf32>
    %7 = arith.truncf %6 : vector<16x256xf32> to vector<16x256xbf16>
    %c0_5 = arith.constant 0 : index
    %c0_6 = arith.constant 0 : index
    %8 = vector.load %arg4[%c0_5, %c0_6] : memref<16x256xbf16, #tpu.memory_space<vmem>>, vector<16x256xbf16>
    tpu.vector_store %arg4[%c0_5, %c0_6], %7 {strides = array<i32>} : memref<16x256xbf16, #tpu.memory_space<vmem>>, vector<16x256xbf16>,
    return
  }
  func.func @transform_0(%arg0: i32) -> (i32, i32) {
    %c0_i32 = arith.constant 0 : i32
    %c0_i32_0 = arith.constant 0 : i32
    return %arg0, %c0_i32 : i32, i32
  }
  func.func @transform_1(%arg0: i32) -> (i32, i32) {
    %c0_i32 = arith.constant 0 : i32
    %c0_i32_0 = arith.constant 0 : i32
    %c0_i32_1 = arith.constant 0 : i32
    return %c0_i32, %c0_i32_0 : i32, i32
  }
  func.func @transform_2(%arg0: i32) -> (i32, i32) {
    %c0_i32 = arith.constant 0 : i32
    %c0_i32_0 = arith.constant 0 : i32
    %c0_i32_1 = arith.constant 0 : i32
    return %c0_i32, %c0_i32_0 : i32, i32
  }
  func.func @transform_3(%arg0: i32) -> (i32, i32) {
    %c0_i32 = arith.constant 0 : i32
    %c0_i32_0 = arith.constant 0 : i32
    return %arg0, %c0_i32 : i32, i32
  }
}

</mosaic_0001>

<llo_original>
// kernel: tpu_custom_call.1
$region0: #{tpu_custom_call.1}
  #allocation0 [shape = 'u32[]', space=smem, size = 0x4, offset = 0x4, fixed_abs, tag = 'smem constant byte address 0x4 - core index']
  #allocation1 [shape = 'u32[144,128]{1,0:T(1,128)}', space=vmem, size = 0x12000, scoped, tag = 'internal scratch']
  %s0 = inlined_call_operand.hbm [shape: f32[16,200], index: 0, kind: input, shape index: {}]
  %s1 = inlined_call_operand.hbm [shape: bf16[200,256], index: 1, kind: input, shape index: {}]
  %s2 = inlined_call_operand.vmem [shape: f32[1,256], index: 2, kind: input, shape index: {}]
  %s3 = inlined_call_operand.hbm [shape: bf16[16,256], index: 3, kind: output, shape index: {}]
  %s4 = sld [smem:[#allocation0]]
  $region30: #{tpu_custom_call.1} parent=0
    _
  %s6 = ssub.s32 1, %s4
  %s7 = scalar_select 0, %s6, %s4
  $region1: #{tpu_custom_call.1} parent=0
    #allocation2 [shape = 'u8[16384]{0}', space=vmem, size = 0x4000, scoped, tag = 'input window, operand 0, single buffered']
    #allocation3 [shape = 's32[1]{0}', space=sflag, size = 0x4, scoped, tag = 'scoped memory for tpu_custom_call.1']
    #allocation4 [shape = 's32[1]{0}', space=sflag, size = 0x4, scoped, tag = 'scoped memory for tpu_custom_call.1']
    #allocation5 [shape = 'u8[102400]{0}', space=vmem, size = 0x19000, scoped, tag = 'input window, operand 1, single buffered']
    #allocation6 [shape = 's32[1]{0}', space=sflag, size = 0x4, scoped, tag = 'scoped memory for tpu_custom_call.1']
    #allocation7 [shape = 'u8[8192]{0}', space=vmem, size = 0x2000, scoped, tag = 'output window, operand 0, single buffered']
    %8 = vsyncpa [#allocation3], 0
    %9 = vsyncpa [#allocation6], 0
    %10 = vsyncpa [#allocation4], 0
    // Predicated region
    $region2: #{tpu_custom_call.1} parent=1 // pred_check
      _
    $region3: #{tpu_custom_call.1} parent=1 // pred_check_branch
      %12 = sbr.rel (0) target = $region5
    $region4: #{tpu_custom_call.1} parent=1 // pred_region
      %s14 = ssub.s32 512, 512
      %15 = vsyncadd [#allocation3], %s14
      %s16 = sshll.u32 [#allocation2], 4
      %s17 = int_to_ptr.vmem [resolvable:$true] %s16
      %22 = dma.hbm_to_vmem [thread:$0]  %s0, 512, %s17, [#allocation3], 256, 256, 16
    $region5: #{tpu_custom_call.1} parent=1 // pred_fallthru
      _
    // Predicated region
    $region6: #{tpu_custom_call.1} parent=1 // pred_check
      _
    $region7: #{tpu_custom_call.1} parent=1 // pred_check_branch
      %24 = sbr.rel (0) target = $region9
    $region8: #{tpu_custom_call.1} parent=1 // pred_region
      %s26 = ssub.s32 3200, 3200
      %27 = vsyncadd [#allocation6], %s26
      %s28 = sshll.u32 [#allocation5], 4
      %s29 = int_to_ptr.vmem [resolvable:$true] %s28
      %34 = dma.hbm_to_vmem [thread:$0]  %s1, 3200, %s29, [#allocation6], 128, 128, 8
    $region9: #{tpu_custom_call.1} parent=1 // pred_fallthru
      _
    // Predicated region
    $region10: #{tpu_custom_call.1} parent=1 // pred_check
      _
    $region11: #{tpu_custom_call.1} parent=1 // pred_check_branch
      %36 = sbr.rel (0) target = $region13
    $region12: #{tpu_custom_call.1} parent=1 // pred_region
      _
    $region13: #{tpu_custom_call.1} parent=1 // pred_fallthru
      _
    // Predicated region
    $region14: #{tpu_custom_call.1} parent=1 // pred_check
      _
    $region15: #{tpu_custom_call.1} parent=1 // pred_check_branch
      %38 = sbr.rel (0) target = $region17
    $region16: #{tpu_custom_call.1} parent=1 // pred_region
      %39 = dma.done [#allocation3], 512
    $region17: #{tpu_custom_call.1} parent=1 // pred_fallthru
      _
    // Predicated region
    $region18: #{tpu_custom_call.1} parent=1 // pred_check
      _
    $region19: #{tpu_custom_call.1} parent=1 // pred_check_branch
      %41 = sbr.rel (0) target = $region21
    $region20: #{tpu_custom_call.1} parent=1 // pred_region
      %42 = dma.done [#allocation6], 3200
    $region21: #{tpu_custom_call.1} parent=1 // pred_fallthru
      _
    %v44 = vld [vmem:[#allocation2] sm:$0xff]
    %v45 = vld [vmem:[#allocation2 + $0x8] sm:$0xff]
    %v46 = vld [vmem:[#allocation2 + $0x10] sm:$0xff]
    %v47 = vld [vmem:[#allocation2 + $0x18] sm:$0xff]
    %v48 = vpack.c.bf16 %v46, %v44
    %v49 = vpack.c.bf16 %v47, %v45
    %v50 = vld [vmem:[#allocation5] sm:$0xff]
    %v51 = vld [vmem:[#allocation5 + $0x8] sm:$0xff]
    %v52 = vld [vmem:[#allocation5 + $0x10] sm:$0xff]
    %v53 = vld [vmem:[#allocation5 + $0x18] sm:$0xff]
    %v54 = vld [vmem:[#allocation5 + $0x20] sm:$0xff]
    %v55 = vld [vmem:[#allocation5 + $0x28] sm:$0xff]
    %v56 = vld [vmem:[#allocation5 + $0x30] sm:$0xff]
    %v57 = vld [vmem:[#allocation5 + $0x38] sm:$0xff]
    %v58 = vld [vmem:[#allocation5 + $0x40] sm:$0xff]
    %v59 = vld [vmem:[#allocation5 + $0x48] sm:$0xff]
    %v60 = vld [vmem:[#allocation5 + $0x50] sm:$0xff]
    %v61 = vld [vmem:[#allocation5 + $0x58] sm:$0xff]
    %v62 = vld [vmem:[#allocation5 + $0x60] sm:$0xff]
    %v63 = vld [vmem:[#allocation5 + $0x68] sm:$0xff]
    %v64 = vld [vmem:[#allocation5 + $0x70] sm:$0xff]
    %v65 = vld [vmem:[#allocation5 + $0x78] sm:$0xff]
    %v66 = vld [vmem:[#allocation5 + $0x80] sm:$0xff]
    %v67 = vld [vmem:[#allocation5 + $0x88] sm:$0xff]
    %v68 = vld [vmem:[#allocation5 + $0x90] sm:$0xff]
    %v69 = vld [vmem:[#allocation5 + $0x98] sm:$0xff]
    %v70 = vld [vmem:[#allocation5 + $0xa0] sm:$0xff]
    %v71 = vld [vmem:[#allocation5 + $0xa8] sm:$0xff]
    %v72 = vld [vmem:[#allocation5 + $0xb0] sm:$0xff]
    %v73 = vld [vmem:[#allocation5 + $0xb8] sm:$0xff]
    %v74 = vld [vmem:[#allocation5 + $0xc0] sm:$0xff]
    %v75 = vld [vmem:[%s2] sm:$0x3]
    %v77 = vlaneseq
    %v78 = vshrl.u32 %v77, 7
    %v79 = vsub.s32 0, %v78
    %v80 = vrot.slane %v75, %v79
    %v81 = vlaneseq
    %v82 = vshrl.u32 %v81, 7
    %v83 = vsub.s32 1, %v82
    %v84 = vrot.slane %v75, %v83
    %v112 = vunpack.c.l.b16 %v50
    %v113 = vunpack.c.h.b16 %v50
    %v114 = vunpack.c.l.b16 %v51
    %v115 = vunpack.c.h.b16 %v51
    %v116 = vunpack.c.l.b16 %v52
    %v117 = vunpack.c.h.b16 %v52
    %v118 = vunpack.c.l.b16 %v53
    %v119 = vunpack.c.h.b16 %v53
    %v120 = vunpack.c.l.b16 %v54
    %v121 = vunpack.c.h.b16 %v54
    %v122 = vunpack.c.l.b16 %v55
    %v123 = vunpack.c.h.b16 %v55
    %v124 = vunpack.c.l.b16 %v56
    %v125 = vunpack.c.h.b16 %v56
    %v126 = vunpack.c.l.b16 %v57
    %v127 = vunpack.c.h.b16 %v57
    %v128 = vunpack.c.l.b16 %v58
    %v129 = vunpack.c.h.b16 %v58
    %v130 = vunpack.c.l.b16 %v59
    %v131 = vunpack.c.h.b16 %v59
    %v132 = vunpack.c.l.b16 %v60
    %v133 = vunpack.c.h.b16 %v60
    %v134 = vunpack.c.l.b16 %v61
    %v135 = vunpack.c.h.b16 %v61
    %v136 = vunpack.c.l.b16 %v62
    %v137 = vunpack.c.h.b16 %v62
    %v138 = vunpack.c.l.b16 %v63
    %v139 = vunpack.c.h.b16 %v63
    %v140 = vunpack.c.l.b16 %v64
    %v141 = vunpack.c.h.b16 %v64
    %v142 = vunpack.c.l.b16 %v65
    %v143 = vunpack.c.h.b16 %v65
    %v144 = vunpack.c.l.b16 %v66
    %v145 = vunpack.c.h.b16 %v66
    %v146 = vunpack.c.l.b16 %v67
    %v147 = vunpack.c.h.b16 %v67
    %v148 = vunpack.c.l.b16 %v68
    %v149 = vunpack.c.h.b16 %v68
    %v150 = vunpack.c.l.b16 %v69
    %v151 = vunpack.c.h.b16 %v69
    %v152 = vunpack.c.l.b16 %v70
    %v153 = vunpack.c.h.b16 %v70
    %v154 = vunpack.c.l.b16 %v71
    %v155 = vunpack.c.h.b16 %v71
    %v156 = vunpack.c.l.b16 %v72
    %v157 = vunpack.c.h.b16 %v72
    %v158 = vunpack.c.l.b16 %v73
    %v159 = vunpack.c.h.b16 %v73
    %v160 = vunpack.c.l.b16 %v74
    %v161 = vunpack.c.h.b16 %v74
    %v162 = vpack.c.b16 %v114, %v112
    %v163 = vpack.c.b16 %v115, %v113
    %v164 = vpack.c.b16 %v118, %v116
    %v165 = vpack.c.b16 %v119, %v117
    %v166 = vpack.c.b16 %v122, %v120
    %v167 = vpack.c.b16 %v123, %v121
    %v168 = vpack.c.b16 %v126, %v124
    %v169 = vpack.c.b16 %v127, %v125
    %v170 = vpack.c.b16 %v130, %v128
    %v171 = vpack.c.b16 %v131, %v129
    %v172 = vpack.c.b16 %v134, %v132
    %v173 = vpack.c.b16 %v135, %v133
    %v174 = vpack.c.b16 %v138, %v136
    %v175 = vpack.c.b16 %v139, %v137
    %v176 = vpack.c.b16 %v142, %v140
    %v177 = vpack.c.b16 %v143, %v141
    %v178 = vpack.c.b16 %v146, %v144
    %v179 = vpack.c.b16 %v147, %v145
    %v180 = vpack.c.b16 %v150, %v148
    %v181 = vpack.c.b16 %v151, %v149
    %v182 = vpack.c.b16 %v154, %v152
    %v183 = vpack.c.b16 %v155, %v153
    %v184 = vpack.c.b16 %v158, %v156
    %v185 = vpack.c.b16 %v159, %v157
    %v186 = vpack.c.b16 %v160, %v160
    %v187 = vpack.c.b16 %v161, %v161
    %vm212 = vcmask 588800
    %v214 = vsel %vm212, %v49, 0
    %vm216 = vcmask 1043456
    %v218 = vsel %vm216, %v186, 0
    %v221 = vsel %vm216, %v187, 0
    %223 = vmatprep.subr.bf16.mxu0 %v177
    %224 = vmatpush1.bf16.msra.mxu0 %v176
    %225 = vmatprep.subr.bf16.mxu0 %v175
    %226 = vmatpush1.bf16.msra.mxu0 %v174
    %227 = vmatprep.subr.bf16.mxu0 %v173
    %228 = vmatpush1.bf16.msra.mxu0 %v172
    %229 = vmatprep.subr.bf16.mxu0 %v171
    %230 = vmatpush1.bf16.msra.mxu0 %v170
    %231 = vmatprep.subr.bf16.mxu0 %v169
    %232 = vmatpush1.bf16.msra.mxu0 %v168
    %233 = vmatprep.subr.bf16.mxu0 %v167
    %234 = vmatpush1.bf16.msra.mxu0 %v166
    %235 = vmatprep.subr.bf16.mxu0 %v165
    %236 = vmatpush1.bf16.msra.mxu0 %v164
    %237 = vmatprep.subr.bf16.mxu0 %v163
    %238 = vmatpush1.bf16.msra.mxu0 %v162
    %239 = vmatprep.subr.bf16.mxu0 0
    %240 = vmatpush2.bf16.msra.mxu0 0
    %241 = vmatprep.subr.bf16.mxu0 0
    %242 = vmatpush2.bf16.msra.mxu0 0
    %243 = vmatprep.subr.bf16.mxu0 0
    %244 = vmatpush2.bf16.msra.mxu0 0
    %245 = vmatprep.subr.bf16.mxu0 %v221
    %246 = vmatpush2.bf16.msra.mxu0 %v218
    %247 = vmatprep.subr.bf16.mxu0 %v185
    %248 = vmatpush2.bf16.msra.mxu0 %v184
    %249 = vmatprep.subr.bf16.mxu0 %v183
    %250 = vmatpush2.bf16.msra.mxu0 %v182
    %251 = vmatprep.subr.bf16.mxu0 %v181
    %252 = vmatpush2.bf16.msra.mxu0 %v180
    %253 = vmatprep.subr.bf16.mxu0 %v179
    %254 = vmatpush2.bf16.msra.mxu0 %v178
    %255 = vmatprep.mubr.bf16.mxu0 %v214
    %256 = vmatmul.mubr.bf16.gmra.mxu0 %v48
    %v257 = vpop.f32.mrf.mxu0
    %v258 = vadd.f32 %v80, %v257
    %v259 = vpop.f32.mrf.mxu0
    %v260 = vadd.f32 %v84, %v259
    %v261 = vpop.f32.mrf.mxu0
    %v262 = vadd.f32 %v80, %v261
    %v263 = vpop.f32.mrf.mxu0
    %v264 = vadd.f32 %v84, %v263
    %265 = vdwg.mxu0
    %v266 = vpack.c.bf16 %v262, %v258
    %v267 = vpack.c.bf16 %v264, %v260
    %v270 = vunpack.c.l.b16 %v266
    %v271 = vunpack.c.l.b16 %v267
    %v272 = vunpack.c.h.b16 %v266
    %v273 = vunpack.c.h.b16 %v267
    %v274 = vpack.c.b16 %v271, %v270
    %v275 = vpack.c.b16 %v273, %v272
    %278 = vst [vmem:[#allocation7] sm:$0xff] %v274
    %279 = vst [vmem:[#allocation7 + $0x8] sm:$0xff] %v275
    // Predicated region
    $region22: #{tpu_custom_call.1} parent=1 // pred_check
      _
    $region23: #{tpu_custom_call.1} parent=1 // pred_check_branch
      %281 = sbr.rel (0) target = $region25
    $region24: #{tpu_custom_call.1} parent=1 // pred_region
      %s283 = ssub.s32 256, 256
      %284 = vsyncadd [#allocation4], %s283
      %s285 = sshll.u32 [#allocation7], 4
      %s286 = int_to_ptr.vmem [resolvable:$true] %s285
      %291 = dma.vmem_to_hbm [thread:$0]  %s286, 256, %s3, [#allocation4], 128, 128, 8
    $region25: #{tpu_custom_call.1} parent=1 // pred_fallthru
      _
    // Predicated region
    $region26: #{tpu_custom_call.1} parent=1 // pred_check
      _
    $region27: #{tpu_custom_call.1} parent=1 // pred_check_branch
      %293 = sbr.rel (0) target = $region29
    $region28: #{tpu_custom_call.1} parent=1 // pred_region
      %294 = dma.done [#allocation4], 256
    $region29: #{tpu_custom_call.1} parent=1 // pred_fallthru
      _
    %295 = vsyncpa [#allocation3], 1
    %296 = vsyncpa [#allocation6], 1
    %297 = vsyncpa [#allocation4], 1

</llo_original>
